<compile_context>
chip_gen: v5e
topology: v5e:2x2
jax: 0.10.0
libtpu: 0.0.40
codegen_flags: <defaults>
</compile_context>

<pallas_src>
import jax
import jax.numpy as jnp
from jax.experimental import pallas as pl
from jax.experimental.pallas import tpu as pltpu


def _conv1x1_kernel(w_ref, b_ref, x_ref, o_ref):
    # w_ref: (C_out, C_in) f32 in SMEM    b_ref: (C_out,) f32 in SMEM
    # x_ref: (C_in, TR, L) f32 in VMEM    o_ref: (C_out, TR, L) f32 in VMEM
    c_in = x_ref.shape[0]
    c_out = o_ref.shape[0]
    # Fully unrolled (C_out = 3, C_in = 4).  Each x_ref[c] is a dense (TR, L)
    # slab -> full-vreg VALU ops and full-vreg (unmasked) stores.
    for o in range(c_out):
        acc = x_ref[0] * w_ref[o, 0]
        for c in range(1, c_in):
            acc = acc + x_ref[c] * w_ref[o, c]
        o_ref[o] = acc + b_ref[o]            # scalar bias from SMEM


def conv1x1_nchw(x, weight, bias, *, target_block_elems=128 * 1024, max_lane=1024):
    """1x1 Conv2d, NCHW semantics, as a Pallas TPU kernel.

    x:      [B, C_in, H, W] float32
    weight: [C_out, C_in]   float32  (torch weight [C_out, C_in, 1, 1] squeezed)
    bias:   [C_out]         float32
    returns [B, C_out, H, W] float32
    """
    B, C_in, H, W = x.shape
    C_out = weight.shape[0]
    HW = H * W

    # NCHW is channel-major per batch: a pure reshape, no data movement.
    x3 = x.reshape(B, C_in, HW)

    # ---- pick the lane width L (multiple of 128) ---------------------------
    # Prefer the largest multiple of 128 (capped) that divides HW exactly so
    # no padding is needed; otherwise pad HW once to a multiple of L.
    L = None
    cand = (min(max_lane, HW) // 128) * 128
    while cand >= 128:
        if HW % cand == 0:
            L = cand
            break
        cand -= 128
    if L is None:
        L = 128 if HW < 512 else 512

    HW_pad = pl.cdiv(HW, L) * L
    if HW_pad != HW:
        # Ragged spatial extent: pad once in HBM (mul/add on padded lanes is
        # harmless; they are sliced away after the kernel).
        x3 = jnp.pad(x3, ((0, 0), (0, 0), (0, HW_pad - HW)))
    R = HW_pad // L
    x4 = x3.reshape(B, C_in, R, L)           # free reshape

    # ---- pick the sublane tile TR (multiple of 8, or full R) ---------------
    tr_cap = max(8, ((target_block_elems // L) // 8) * 8)
    if R <= tr_cap:
        TR = R                                # full dim -> always layout-legal
    else:
        TR = tr_cap                           # multiple of 8
    n_tiles = pl.cdiv(R, TR)                  # ragged last tile handled by masking

    out4 = pl.pallas_call(
        _conv1x1_kernel,
        out_shape=jax.ShapeDtypeStruct((B, C_out, R, L), jnp.float32),
        grid=(B, n_tiles),
        in_specs=[
            pl.BlockSpec(memory_space=pltpu.MemorySpace.SMEM),   # weight (3, 4)
            pl.BlockSpec(memory_space=pltpu.MemorySpace.SMEM),   # bias (3,)
            pl.BlockSpec((pl.Squeezed(), C_in, TR, L), lambda b, i: (b, 0, i, 0)),
        ],
        out_specs=pl.BlockSpec((pl.Squeezed(), C_out, TR, L),
                               lambda b, i: (b, 0, i, 0)),
        compiler_params=pltpu.CompilerParams(
            dimension_semantics=("parallel", "parallel")),
        cost_estimate=pl.CostEstimate(
            flops=2 * B * C_out * C_in * HW,
            transcendentals=0,
            bytes_accessed=(C_in + C_out) * B * HW_pad * 4),
    )(weight, bias, x4)

    out3 = out4.reshape(B, C_out, HW_pad)
    if HW_pad != HW:
        out3 = out3[:, :, :HW]
    return out3.reshape(B, C_out, H, W)


def model4band_forward(x, params):
    """Pallas version of Model4Band.forward (first conv only)."""
    y = conv1x1_nchw(x, params["first_w"], params["first_b"])
    # TODO(synk): apply deeplabv3/lraspp backbone here; no in-script Pallas equivalent.
    return y


def _init_params(key, num_inp_feats=4, out_ch=3):
    kw, kb = jax.random.split(key)
    # deterministic synthetic init (torch uses kaiming-uniform; shapes match:
    # weight [3, 4, 1, 1] -> [3, 4], bias [3])
    first_w = jax.random.normal(kw, (out_ch, num_inp_feats), jnp.float32) * 0.1
    first_b = jax.random.normal(kb, (out_ch,), jnp.float32) * 0.1
    return {"first_w": first_w, "first_b": first_b}


if __name__ == "__main__":
    key = jax.random.PRNGKey(0)
    k_x, k_p = jax.random.split(key)

    B, C, H, W = 2, 4, 16, 16
    x = jax.random.normal(k_x, (B, C, H, W), jnp.float32)
    params = _init_params(k_p, num_inp_feats=C, out_ch=3)

    fwd = jax.jit(model4band_forward)
    out = fwd(x, params)
    out = jax.block_until_ready(out)

    # reference: plain-JAX 1x1 conv (NCHW)
    ref = (jnp.einsum("oc,bchw->bohw", params["first_w"], x)
           + params["first_b"][None, :, None, None])
    assert out.shape == (B, 3, H, W), out.shape
    assert jnp.allclose(out, ref, atol=1e-5, rtol=1e-5), float(jnp.max(jnp.abs(out - ref)))

    print("KERNEL_OK")
</pallas_src>

<mosaic_0001>
module attributes {stable_mosaic.version = 11 : i64} {
  func.func @_conv1x1_kernel(%arg0: i32, %arg1: i32, %arg2: memref<3x4xf32, #tpu.memory_space<smem>>, %arg3: memref<3xf32, #tpu.memory_space<smem>>, %arg4: memref<1x4x1x256xf32, #tpu.memory_space<vmem>>, %arg5: memref<1x3x1x256xf32, #tpu.memory_space<vmem>>) attributes {dimension_semantics = [#tpu.dimension_semantics<parallel>, #tpu.dimension_semantics<parallel>], iteration_bounds = array<i64: 2, 1>, scalar_prefetch = 0 : i64, scratch_operands = 0 : i64, tpu.core_type = #tpu.core_type<tc>, window_params = [{transform_indices = @transform_0, window_bounds = array<i64: 3, 4>}, {transform_indices = @transform_1, window_bounds = array<i64: 3>}, {transform_indices = @transform_2, window_bounds = array<i64: 1, 4, 1, 256>}, {transform_indices = @transform_3, window_bounds = array<i64: 1, 3, 1, 256>}]} {
    %c0 = arith.constant 0 : index
    %c0_0 = arith.constant 0 : index
    %c0_1 = arith.constant 0 : index
    %c0_2 = arith.constant 0 : index
    %0 = vector.load %arg4[%c0, %c0_0, %c0_1, %c0_2] : memref<1x4x1x256xf32, #tpu.memory_space<vmem>>, vector<1x1x1x256xf32>
    %1 = vector.shape_cast %0 : vector<1x1x1x256xf32> to vector<1x256xf32>
    %c0_3 = arith.constant 0 : index
    %c0_4 = arith.constant 0 : index
    %2 = memref.load %arg2[%c0_3, %c0_4] : memref<3x4xf32, #tpu.memory_space<smem>>
    %3 = vector.broadcast %2 : f32 to vector<1x256xf32>
    %4 = arith.mulf %1, %3 : vector<1x256xf32>
    %c0_5 = arith.constant 0 : index
    %c1 = arith.constant 1 : index
    %c0_6 = arith.constant 0 : index
    %c0_7 = arith.constant 0 : index
    %5 = vector.load %arg4[%c0_5, %c1, %c0_6, %c0_7] : memref<1x4x1x256xf32, #tpu.memory_space<vmem>>, vector<1x1x1x256xf32>
    %6 = vector.shape_cast %5 : vector<1x1x1x256xf32> to vector<1x256xf32>
    %c0_8 = arith.constant 0 : index
    %c1_9 = arith.constant 1 : index
    %7 = memref.load %arg2[%c0_8, %c1_9] : memref<3x4xf32, #tpu.memory_space<smem>>
    %8 = vector.broadcast %7 : f32 to vector<1x256xf32>
    %9 = arith.mulf %6, %8 : vector<1x256xf32>
    %10 = arith.addf %4, %9 : vector<1x256xf32>
    %c0_10 = arith.constant 0 : index
    %c2 = arith.constant 2 : index
    %c0_11 = arith.constant 0 : index
    %c0_12 = arith.constant 0 : index
    %11 = vector.load %arg4[%c0_10, %c2, %c0_11, %c0_12] : memref<1x4x1x256xf32, #tpu.memory_space<vmem>>, vector<1x1x1x256xf32>
    %12 = vector.shape_cast %11 : vector<1x1x1x256xf32> to vector<1x256xf32>
    %c0_13 = arith.constant 0 : index
    %c2_14 = arith.constant 2 : index
    %13 = memref.load %arg2[%c0_13, %c2_14] : memref<3x4xf32, #tpu.memory_space<smem>>
    %14 = vector.broadcast %13 : f32 to vector<1x256xf32>
    %15 = arith.mulf %12, %14 : vector<1x256xf32>
    %16 = arith.addf %10, %15 : vector<1x256xf32>
    %c0_15 = arith.constant 0 : index
    %c3 = arith.constant 3 : index
    %c0_16 = arith.constant 0 : index
    %c0_17 = arith.constant 0 : index
    %17 = vector.load %arg4[%c0_15, %c3, %c0_16, %c0_17] : memref<1x4x1x256xf32, #tpu.memory_space<vmem>>, vector<1x1x1x256xf32>
    %18 = vector.shape_cast %17 : vector<1x1x1x256xf32> to vector<1x256xf32>
    %c0_18 = arith.constant 0 : index
    %c3_19 = arith.constant 3 : index
    %19 = memref.load %arg2[%c0_18, %c3_19] : memref<3x4xf32, #tpu.memory_space<smem>>
    %20 = vector.broadcast %19 : f32 to vector<1x256xf32>
    %21 = arith.mulf %18, %20 : vector<1x256xf32>
    %22 = arith.addf %16, %21 : vector<1x256xf32>
    %c0_20 = arith.constant 0 : index
    %23 = memref.load %arg3[%c0_20] : memref<3xf32, #tpu.memory_space<smem>>
    %24 = vector.broadcast %23 : f32 to vector<1x256xf32>
    %25 = arith.addf %22, %24 : vector<1x256xf32>
    %c0_21 = arith.constant 0 : index
    %c0_22 = arith.constant 0 : index
    %c0_23 = arith.constant 0 : index
    %c0_24 = arith.constant 0 : index
    %26 = vector.load %arg5[%c0_21, %c0_22, %c0_23, %c0_24] : memref<1x3x1x256xf32, #tpu.memory_space<vmem>>, vector<1x1x1x256xf32>
    %27 = vector.shape_cast %26 : vector<1x1x1x256xf32> to vector<1x256xf32>
    %28 = vector.shape_cast %25 : vector<1x256xf32> to vector<1x1x1x256xf32>
    tpu.vector_store %arg5[%c0_21, %c0_22, %c0_23, %c0_24], %28 {strides = array<i32>} : memref<1x3x1x256xf32, #tpu.memory_space<vmem>>, vector<1x1x1x256xf32>,
    %c0_25 = arith.constant 0 : index
    %c0_26 = arith.constant 0 : index
    %c0_27 = arith.constant 0 : index
    %c0_28 = arith.constant 0 : index
    %29 = vector.load %arg4[%c0_25, %c0_26, %c0_27, %c0_28] : memref<1x4x1x256xf32, #tpu.memory_space<vmem>>, vector<1x1x1x256xf32>
    %30 = vector.shape_cast %29 : vector<1x1x1x256xf32> to vector<1x256xf32>
    %c1_29 = arith.constant 1 : index
    %c0_30 = arith.constant 0 : index
    %31 = memref.load %arg2[%c1_29, %c0_30] : memref<3x4xf32, #tpu.memory_space<smem>>
    %32 = vector.broadcast %31 : f32 to vector<1x256xf32>
    %33 = arith.mulf %30, %32 : vector<1x256xf32>
    %c0_31 = arith.constant 0 : index
    %c1_32 = arith.constant 1 : index
    %c0_33 = arith.constant 0 : index
    %c0_34 = arith.constant 0 : index
    %34 = vector.load %arg4[%c0_31, %c1_32, %c0_33, %c0_34] : memref<1x4x1x256xf32, #tpu.memory_space<vmem>>, vector<1x1x1x256xf32>
    %35 = vector.shape_cast %34 : vector<1x1x1x256xf32> to vector<1x256xf32>
    %c1_35 = arith.constant 1 : index
    %c1_36 = arith.constant 1 : index
    %36 = memref.load %arg2[%c1_35, %c1_36] : memref<3x4xf32, #tpu.memory_space<smem>>
    %37 = vector.broadcast %36 : f32 to vector<1x256xf32>
    %38 = arith.mulf %35, %37 : vector<1x256xf32>
    %39 = arith.addf %33, %38 : vector<1x256xf32>
    %c0_37 = arith.constant 0 : index
    %c2_38 = arith.constant 2 : index
    %c0_39 = arith.constant 0 : index
    %c0_40 = arith.constant 0 : index
    %40 = vector.load %arg4[%c0_37, %c2_38, %c0_39, %c0_40] : memref<1x4x1x256xf32, #tpu.memory_space<vmem>>, vector<1x1x1x256xf32>
    %41 = vector.shape_cast %40 : vector<1x1x1x256xf32> to vector<1x256xf32>
    %c1_41 = arith.constant 1 : index
    %c2_42 = arith.constant 2 : index
    %42 = memref.load %arg2[%c1_41, %c2_42] : memref<3x4xf32, #tpu.memory_space<smem>>
    %43 = vector.broadcast %42 : f32 to vector<1x256xf32>
    %44 = arith.mulf %41, %43 : vector<1x256xf32>
    %45 = arith.addf %39, %44 : vector<1x256xf32>
    %c0_43 = arith.constant 0 : index
    %c3_44 = arith.constant 3 : index
    %c0_45 = arith.constant 0 : index
    %c0_46 = arith.constant 0 : index
    %46 = vector.load %arg4[%c0_43, %c3_44, %c0_45, %c0_46] : memref<1x4x1x256xf32, #tpu.memory_space<vmem>>, vector<1x1x1x256xf32>
    %47 = vector.shape_cast %46 : vector<1x1x1x256xf32> to vector<1x256xf32>
    %c1_47 = arith.constant 1 : index
    %c3_48 = arith.constant 3 : index
    %48 = memref.load %arg2[%c1_47, %c3_48] : memref<3x4xf32, #tpu.memory_space<smem>>
    %49 = vector.broadcast %48 : f32 to vector<1x256xf32>
    %50 = arith.mulf %47, %49 : vector<1x256xf32>
    %51 = arith.addf %45, %50 : vector<1x256xf32>
    %c1_49 = arith.constant 1 : index
    %52 = memref.load %arg3[%c1_49] : memref<3xf32, #tpu.memory_space<smem>>
    %53 = vector.broadcast %52 : f32 to vector<1x256xf32>
    %54 = arith.addf %51, %53 : vector<1x256xf32>
    %c0_50 = arith.constant 0 : index
    %c1_51 = arith.constant 1 : index
    %c0_52 = arith.constant 0 : index
    %c0_53 = arith.constant 0 : index
    %55 = vector.load %arg5[%c0_50, %c1_51, %c0_52, %c0_53] : memref<1x3x1x256xf32, #tpu.memory_space<vmem>>, vector<1x1x1x256xf32>
    %56 = vector.shape_cast %55 : vector<1x1x1x256xf32> to vector<1x256xf32>
    %57 = vector.shape_cast %54 : vector<1x256xf32> to vector<1x1x1x256xf32>
    tpu.vector_store %arg5[%c0_50, %c1_51, %c0_52, %c0_53], %57 {strides = array<i32>} : memref<1x3x1x256xf32, #tpu.memory_space<vmem>>, vector<1x1x1x256xf32>,
    %c0_54 = arith.constant 0 : index
    %c0_55 = arith.constant 0 : index
    %c0_56 = arith.constant 0 : index
    %c0_57 = arith.constant 0 : index
    %58 = vector.load %arg4[%c0_54, %c0_55, %c0_56, %c0_57] : memref<1x4x1x256xf32, #tpu.memory_space<vmem>>, vector<1x1x1x256xf32>
    %59 = vector.shape_cast %58 : vector<1x1x1x256xf32> to vector<1x256xf32>
    %c2_58 = arith.constant 2 : index
    %c0_59 = arith.constant 0 : index
    %60 = memref.load %arg2[%c2_58, %c0_59] : memref<3x4xf32, #tpu.memory_space<smem>>
    %61 = vector.broadcast %60 : f32 to vector<1x256xf32>
    %62 = arith.mulf %59, %61 : vector<1x256xf32>
    %c0_60 = arith.constant 0 : index
    %c1_61 = arith.constant 1 : index
    %c0_62 = arith.constant 0 : index
    %c0_63 = arith.constant 0 : index
    %63 = vector.load %arg4[%c0_60, %c1_61, %c0_62, %c0_63] : memref<1x4x1x256xf32, #tpu.memory_space<vmem>>, vector<1x1x1x256xf32>
    %64 = vector.shape_cast %63 : vector<1x1x1x256xf32> to vector<1x256xf32>
    %c2_64 = arith.constant 2 : index
    %c1_65 = arith.constant 1 : index
    %65 = memref.load %arg2[%c2_64, %c1_65] : memref<3x4xf32, #tpu.memory_space<smem>>
    %66 = vector.broadcast %65 : f32 to vector<1x256xf32>
    %67 = arith.mulf %64, %66 : vector<1x256xf32>
    %68 = arith.addf %62, %67 : vector<1x256xf32>
    %c0_66 = arith.constant 0 : index
    %c2_67 = arith.constant 2 : index
    %c0_68 = arith.constant 0 : index
    %c0_69 = arith.constant 0 : index
    %69 = vector.load %arg4[%c0_66, %c2_67, %c0_68, %c0_69] : memref<1x4x1x256xf32, #tpu.memory_space<vmem>>, vector<1x1x1x256xf32>
    %70 = vector.shape_cast %69 : vector<1x1x1x256xf32> to vector<1x256xf32>
    %c2_70 = arith.constant 2 : index
    %c2_71 = arith.constant 2 : index
    %71 = memref.load %arg2[%c2_70, %c2_71] : memref<3x4xf32, #tpu.memory_space<smem>>
    %72 = vector.broadcast %71 : f32 to vector<1x256xf32>
    %73 = arith.mulf %70, %72 : vector<1x256xf32>
    %74 = arith.addf %68, %73 : vector<1x256xf32>
    %c0_72 = arith.constant 0 : index
    %c3_73 = arith.constant 3 : index
    %c0_74 = arith.constant 0 : index
    %c0_75 = arith.constant 0 : index
    %75 = vector.load %arg4[%c0_72, %c3_73, %c0_74, %c0_75] : memref<1x4x1x256xf32, #tpu.memory_space<vmem>>, vector<1x1x1x256xf32>
    %76 = vector.shape_cast %75 : vector<1x1x1x256xf32> to vector<1x256xf32>
    %c2_76 = arith.constant 2 : index
    %c3_77 = arith.constant 3 : index
    %77 = memref.load %arg2[%c2_76, %c3_77] : memref<3x4xf32, #tpu.memory_space<smem>>
    %78 = vector.broadcast %77 : f32 to vector<1x256xf32>
    %79 = arith.mulf %76, %78 : vector<1x256xf32>
    %80 = arith.addf %74, %79 : vector<1x256xf32>
    %c2_78 = arith.constant 2 : index
    %81 = memref.load %arg3[%c2_78] : memref<3xf32, #tpu.memory_space<smem>>
    %82 = vector.broadcast %81 : f32 to vector<1x256xf32>
    %83 = arith.addf %80, %82 : vector<1x256xf32>
    %c0_79 = arith.constant 0 : index
    %c2_80 = arith.constant 2 : index
    %c0_81 = arith.constant 0 : index
    %c0_82 = arith.constant 0 : index
    %84 = vector.load %arg5[%c0_79, %c2_80, %c0_81, %c0_82] : memref<1x3x1x256xf32, #tpu.memory_space<vmem>>, vector<1x1x1x256xf32>
    %85 = vector.shape_cast %84 : vector<1x1x1x256xf32> to vector<1x256xf32>
    %86 = vector.shape_cast %83 : vector<1x256xf32> to vector<1x1x1x256xf32>
    tpu.vector_store %arg5[%c0_79, %c2_80, %c0_81, %c0_82], %86 {strides = array<i32>} : memref<1x3x1x256xf32, #tpu.memory_space<vmem>>, vector<1x1x1x256xf32>,
    return
  }
  func.func @transform_0(%arg0: i32, %arg1: i32) -> (i32, i32) {
    %c0_i32 = arith.constant 0 : i32
    %c0_i32_0 = arith.constant 0 : i32
    %c0_i32_1 = arith.constant 0 : i32
    return %c0_i32, %c0_i32_0 : i32, i32
  }
  func.func @transform_1(%arg0: i32, %arg1: i32) -> i32 {
    %c0_i32 = arith.constant 0 : i32
    %c0_i32_0 = arith.constant 0 : i32
    return %c0_i32 : i32
  }
  func.func @transform_2(%arg0: i32, %arg1: i32) -> (i32, i32, i32, i32) {
    %c0_i32 = arith.constant 0 : i32
    %c0_i32_0 = arith.constant 0 : i32
    %c0_i32_1 = arith.constant 0 : i32
    return %arg0, %c0_i32, %arg1, %c0_i32_0 : i32, i32, i32, i32
  }
  func.func @transform_3(%arg0: i32, %arg1: i32) -> (i32, i32, i32, i32) {
    %c0_i32 = arith.constant 0 : i32
    %c0_i32_0 = arith.constant 0 : i32
    %c0_i32_1 = arith.constant 0 : i32
    return %arg0, %c0_i32, %arg1, %c0_i32_0 : i32, i32, i32, i32
  }
}

</mosaic_0001>

<llo_original>
// kernel: model4band_forward.1
$region0: #{model4band_forward.1}
  #allocation0 [shape = 'u32[]', space=smem, size = 0x4, offset = 0x4, fixed_abs, tag = 'smem constant byte address 0x4 - core index']
  #allocation1 [shape = 'u32[72,128]{1,0:T(1,128)}', space=vmem, size = 0x9000, scoped, tag = 'internal scratch']
  %s0 = inlined_call_operand.vmem [shape: f32[3,4], index: 0, kind: input, shape index: {}]
  %s1 = inlined_call_operand.vmem [shape: f32[3], index: 1, kind: input, shape index: {}]
  %s2 = inlined_call_operand.vmem [shape: f32[2,4,1,256], index: 2, kind: input, shape index: {}]
  %s3 = inlined_call_operand.vmem [shape: f32[2,3,1,256], index: 3, kind: output, shape index: {}]
  %s4 = sld [smem:[#allocation0]]
  $region53: #{model4band_forward.1} parent=0
    _
  %s6 = ssub.s32 1, %s4
  %s7 = scalar_select 0, %s6, %s4
  $region1: #{model4band_forward.1} parent=0
    #allocation2 [shape = 'u8[2048]{0}', space=smem, size = 0x800, scoped, tag = 'input window, operand 0, single buffered']
    #allocation3 [shape = 's32[2]{0}', space=sflag, size = 0x8, scoped, tag = 'scoped memory for model4band_forward.1']
    #allocation4 [shape = 'u8[512]{0}', space=smem, size = 0x200, scoped, tag = 'input window, operand 1, single buffered']
    #allocation5 [shape = 's32[1]{0}', space=sflag, size = 0x4, scoped, tag = 'scoped memory for model4band_forward.1']
    %8 = vsyncpa [#allocation3], 0
    %9 = vsyncpa [#allocation5], 0
    loop: start=0, step=1, limit=4
    $region2: #{model4band_forward.1} parent=1 // loop_pre_header
      _
    $region3: #{model4band_forward.1} parent=1 // loop_header
      %s11 = sphi 0, %s15
      %p12 = scmp.ge.s32.totalorder %s11, 4
      %s18 = sphi 0, %s30
      %s19 = sphi 0, %s26
      %s20 = sphi 0, %s18
      %s21 = sphi 0, %s19
      %s22 = sphi 0, %s20
      %s23 = sphi 0, %s21
      %s31 = sphi 0, %s31
      %s33 = sphi 0, %s31
      %s34 = sphi 0, %s33
      %s48 = sphi 0, %s34
      %s52 = sphi 0, %s52
      %s54 = sphi 0, %s52
      %s55 = sphi 0, %s54
      %s69 = sphi 0, %s55
      %s77 = sphi 0, %s79
      %s80 = sphi 0, %s77
      %s81 = sphi 0, %s80
      %s97 = sphi 0, %s81
      %s105 = sphi 0, %s107
      %s108 = sphi 0, %s105
      %s109 = sphi 0, %s108
      %s125 = sphi 0, %s109
    $region4: #{model4band_forward.1} parent=1 // loop_header_branch
      %14 = sbr.rel (%p12) target = $region8
    $region5: #{model4band_forward.1} parent=1 // loop_body
      %s16 = ssub.s32 %s11, 1
      %s17 = ssub.s32 %s11, 2
      %s24 = sadd.s32 1, %s19
      %p25 = scmp.ge.s32.totalorder %s24, 1
      %s26 = scalar_select %p25, 0, %s24
      %s27 = sadd.s32 1, %s18
      %s28 = scalar_select %p25, %s27, %s18
      %p29 = scmp.ge.s32.totalorder %s28, 2
      %s30 = scalar_select %p29, 0, %s28
      %s32 = sadd.s32 %s31, 1
      %p35 = scmp.eq.s32.totalorder %s11, 1
      %p36 = scmp.ne.s32.totalorder %s31, %s33
      %p37 = scmp.eq.s32.totalorder %s11, 0
      %p38 = por %p36, %p37
      %p39 = scmp.ne.s32.totalorder %s31, %s33
      %p40 = scmp.eq.s32.totalorder %s16, 1
      %p41 = por %p39, %p40
      %p42 = scmp.ne.s32.totalorder %s33, %s34
      %p43 = scmp.eq.s32.totalorder %s16, 0
      %p44 = por %p42, %p43
      %p45 = scmp.ne.s32.totalorder %s33, %s34
      %p46 = scmp.eq.s32.totalorder %s17, 1
      %p47 = por %p45, %p46
      %p49 = scmp.ne.s32.totalorder %s34, %s48
      %p50 = scmp.eq.s32.totalorder %s17, 0
      %p51 = por %p49, %p50
      %s53 = sadd.s32 %s52, 1
      %p56 = scmp.eq.s32.totalorder %s11, 1
      %p57 = scmp.ne.s32.totalorder %s52, %s54
      %p58 = scmp.eq.s32.totalorder %s11, 0
      %p59 = por %p57, %p58
      %p60 = scmp.ne.s32.totalorder %s52, %s54
      %p61 = scmp.eq.s32.totalorder %s16, 1
      %p62 = por %p60, %p61
      %p63 = scmp.ne.s32.totalorder %s54, %s55
      %p64 = scmp.eq.s32.totalorder %s16, 0
      %p65 = por %p63, %p64
      %p66 = scmp.ne.s32.totalorder %s54, %s55
      %p67 = scmp.eq.s32.totalorder %s17, 1
      %p68 = por %p66, %p67
      %p70 = scmp.ne.s32.totalorder %s55, %s69
      %p71 = scmp.eq.s32.totalorder %s17, 0
      %p72 = por %p70, %p71
      %s73 = ssub.s32 %s18, %s30
      %s74 = ssub.s32 %s19, %s26
      %s75 = sor.u32 %s73, %s74
      %p76 = scmp.eq.s32.totalorder %s75, 0
      %s78 = sadd.s32 %s77, 1
      %s79 = scalar_select %p76, %s77, %s78
      %p82 = pneg %p76
      %p83 = scmp.eq.s32.totalorder %s11, 1
      %p84 = por %p82, %p83
      %p85 = scmp.ne.s32.totalorder %s77, %s80
      %p86 = scmp.eq.s32.totalorder %s11, 0
      %p87 = por %p85, %p86
      %p88 = scmp.ne.s32.totalorder %s77, %s80
      %p89 = scmp.eq.s32.totalorder %s16, 1
      %p90 = por %p88, %p89
      %p91 = scmp.ne.s32.totalorder %s80, %s81
      %p92 = scmp.eq.s32.totalorder %s16, 0
      %p93 = por %p91, %p92
      %p94 = scmp.ne.s32.totalorder %s80, %s81
      %p95 = scmp.eq.s32.totalorder %s17, 1
      %p96 = por %p94, %p95
      %p98 = scmp.ne.s32.totalorder %s81, %s97
      %p99 = scmp.eq.s32.totalorder %s17, 0
      %p100 = por %p98, %p99
      %s101 = ssub.s32 %s18, %s30
      %s102 = ssub.s32 %s19, %s26
      %s103 = sor.u32 %s101, %s102
      %p104 = scmp.eq.s32.totalorder %s103, 0
      %s106 = sadd.s32 %s105, 1
      %s107 = scalar_select %p104, %s105, %s106
      %p110 = pneg %p104
      %p111 = scmp.eq.s32.totalorder %s11, 1
      %p112 = por %p110, %p111
      %p113 = scmp.ne.s32.totalorder %s105, %s108
      %p114 = scmp.eq.s32.totalorder %s11, 0
      %p115 = por %p113, %p114
      %p116 = scmp.ne.s32.totalorder %s105, %s108
      %p117 = scmp.eq.s32.totalorder %s16, 1
      %p118 = por %p116, %p117
      %p119 = scmp.ne.s32.totalorder %s108, %s109
      %p120 = scmp.eq.s32.totalorder %s16, 0
      %p121 = por %p119, %p120
      %p122 = scmp.ne.s32.totalorder %s108, %s109
      %p123 = scmp.eq.s32.totalorder %s17, 1
      %p124 = por %p122, %p123
      %p126 = scmp.ne.s32.totalorder %s109, %s125
      %p127 = scmp.eq.s32.totalorder %s17, 0
      %p128 = por %p126, %p127
      %p129 = scmp.le.s32.totalorder 1, %s11
      %p130 = scmp.lt.s32.totalorder %s11, 3
      %p131 = pnand %p129, %p130
      %p132 = pneg %p131
      // Predicated region
      $region9: #{model4band_forward.1} parent=5 // pred_check
        _
      $region10: #{model4band_forward.1} parent=5 // pred_check_branch
        %134 = sbr.rel (%p131) target = $region12
      $region11: #{model4band_forward.1} parent=5 // pred_region
        %s135 = ssub.s32 %s11, 1
        // Predicated region
        $region13: #{model4band_forward.1} parent=11 // pred_check
          %p136 = pneg %p44
        $region14: #{model4band_forward.1} parent=11 // pred_check_branch
          %138 = sbr.rel (%p136) target = $region16
        $region15: #{model4band_forward.1} parent=11 // pred_region
          %140 = vsyncadd [#allocation3], 0
          %s142 = sshll.u32 %s0, 4
          %s143 = int_to_ptr.vmem [resolvable:$true] %s142
          %145 = dma.vmem_to_smem %s143, 64, [#allocation2], [#allocation3]
        $region16: #{model4band_forward.1} parent=11 // pred_fallthru
          _
        // Predicated region
        $region17: #{model4band_forward.1} parent=11 // pred_check
          %p146 = pneg %p65
        $region18: #{model4band_forward.1} parent=11 // pred_check_branch
          %148 = sbr.rel (%p146) target = $region20
        $region19: #{model4band_forward.1} parent=11 // pred_region
          %150 = vsyncadd [#allocation5], 0
          %s152 = sshll.u32 %s1, 4
          %s153 = int_to_ptr.vmem [resolvable:$true] %s152
          %155 = dma.vmem_to_smem %s153, 16, [#allocation4], [#allocation5]
        $region20: #{model4band_forward.1} parent=11 // pred_fallthru
          _
      $region12: #{model4band_forward.1} parent=5 // pred_fallthru
        _
      %p156 = scmp.lt.s32.totalorder %s11, 2
      // Predicated region
      $region21: #{model4band_forward.1} parent=5 // pred_check
        %p157 = pneg %p156
      $region22: #{model4band_forward.1} parent=5 // pred_check_branch
        %159 = sbr.rel (%p157) target = $region24
      $region23: #{model4band_forward.1} parent=5 // pred_region
        // Predicated region
        $region25: #{model4band_forward.1} parent=23 // pred_check
          %p160 = pneg %p87
        $region26: #{model4band_forward.1} parent=23 // pred_check_branch
          %162 = sbr.rel (%p160) target = $region28
        $region27: #{model4band_forward.1} parent=23 // pred_region
          %p163 = scmp.lt.s32.totalorder %s18, 1
          %s164 = scalar_select %p163, %s18, 1
          %p165 = scmp.lt.s32.totalorder %s19, 0
          %s166 = scalar_select %p165, %s19, 0
          %s167 = smul.addr %s166, 2
          %s168 = smul.addr %s164, 8
          %s169 = sadd.s32 %s167, %s168
          %s170 = scalar_lea.vmem %s2, %s169
        $region28: #{model4band_forward.1} parent=23 // pred_fallthru
          _
      $region24: #{model4band_forward.1} parent=5 // pred_fallthru
        _
      %p171 = scmp.le.s32.totalorder 1, %s11
      %p172 = scmp.lt.s32.totalorder %s11, 3
      %p173 = pnand %p171, %p172
      %p174 = pneg %p173
      // Predicated region
      $region29: #{model4band_forward.1} parent=5 // pred_check
        _
      $region30: #{model4band_forward.1} parent=5 // pred_check_branch
        %176 = sbr.rel (%p173) target = $region32
      $region31: #{model4band_forward.1} parent=5 // pred_region
        %s177 = ssub.s32 %s11, 1
        // Predicated region
        $region33: #{model4band_forward.1} parent=31 // pred_check
          %p178 = pneg %p44
        $region34: #{model4band_forward.1} parent=31 // pred_check_branch
          %180 = sbr.rel (%p178) target = $region36
        $region35: #{model4band_forward.1} parent=31 // pred_region
          %182 = dma.done [#allocation3], 64
        $region36: #{model4band_forward.1} parent=31 // pred_fallthru
          _
        // Predicated region
        $region37: #{model4band_forward.1} parent=31 // pred_check
          %p183 = pneg %p65
        $region38: #{model4band_forward.1} parent=31 // pred_check_branch
          %185 = sbr.rel (%p183) target = $region40
        $region39: #{model4band_forward.1} parent=31 // pred_region
          %187 = dma.done [#allocation5], 16
        $region40: #{model4band_forward.1} parent=31 // pred_fallthru
          _
        %188 = sfence
        %p189 = pneg %p44
        %p190 = pneg %p41
        %p191 = pneg %p65
        %p192 = pneg %p62
        %p193 = scmp.lt.s32.totalorder %s20, 1
        %s194 = scalar_select %p193, %s20, 1
        %p195 = scmp.lt.s32.totalorder %s21, 0
        %s196 = scalar_select %p195, %s21, 0
        %s197 = smul.addr %s196, 2
        %s198 = smul.addr %s194, 8
        %s199 = sadd.s32 %s197, %s198
        %s200 = scalar_lea.vmem %s2, %s199
        %p201 = pneg %p93
        %p202 = pneg %p90
        %p203 = pneg %p121
        %p204 = pneg %p118
        %p205 = scmp.lt.s32.totalorder %s20, 1
        %s206 = scalar_select %p205, %s20, 1
        %p207 = scmp.lt.s32.totalorder %s21, 0
        %s208 = scalar_select %p207, %s21, 0
        %s209 = smul.addr %s208, 2
        %s210 = smul.addr %s206, 6
        %s211 = sadd.s32 %s209, %s210
        %s212 = scalar_lea.vmem %s3, %s211
        %p213 = scmp.lt.s32.totalorder %s20, 1
        %s214 = scalar_select %p213, %s20, 1
        %p215 = scmp.lt.s32.totalorder %s21, 0
        %s216 = scalar_select %p215, %s21, 0
        %s217 = smul.addr %s216, 2
        %s218 = smul.addr %s214, 8
        %s219 = sadd.s32 %s217, %s218
        %s220 = scalar_lea.vmem %s2, %s219
        %p221 = scmp.lt.s32.totalorder %s20, 1
        %s222 = scalar_select %p221, %s20, 1
        %p223 = scmp.lt.s32.totalorder %s21, 0
        %s224 = scalar_select %p223, %s21, 0
        %s225 = smul.addr %s224, 2
        %s226 = smul.addr %s222, 6
        %s227 = sadd.s32 %s225, %s226
        %s228 = scalar_lea.vmem %s3, %s227
        %v229 = vld [vmem:[%s220] sm:$0x3]
        %s230 = sld [smem:[#allocation2]]
        %v231 = vstv %s230
        %v232 = vmul.f32 %v229, %v231
        %s233 = scalar_lea.vmem %s220, 2
        %v234 = vld [vmem:[%s233] sm:$0x3]
        %s235 = sld [smem:[#allocation2 + $0x1]]
        %v236 = vstv %s235
        %v237 = vmul.f32 %v234, %v236
        %v238 = vadd.f32 %v232, %v237
        %s239 = scalar_lea.vmem %s220, 4
        %v240 = vld [vmem:[%s239] sm:$0x3]
        %s241 = sld [smem:[#allocation2 + $0x2]]
        %v242 = vstv %s241
        %v243 = vmul.f32 %v240, %v242
        %v244 = vadd.f32 %v238, %v243
        %s245 = scalar_lea.vmem %s220, 6
        %v246 = vld [vmem:[%s245] sm:$0x3]
        %s247 = sld [smem:[#allocation2 + $0x3]]
        %v248 = vstv %s247
        %v249 = vmul.f32 %v246, %v248
        %v250 = vadd.f32 %v244, %v249
        %s251 = sld [smem:[#allocation4]]
        %v252 = vstv %s251
        %v253 = vadd.f32 %v250, %v252
        %v254 = vlaneseq
        %vm255 = vcmp.ge.s32.totalorder %v254, 0
        %vm256 = vcmp.lt.s32.totalorder %v254, 256
        %vm257 = vmand %vm255, %vm256
        %258 = vst.msk [vmem:[%s228] sm:$0x3] %vm257, %v253
        %v259 = vld [vmem:[%s220] sm:$0x3]
        %s260 = sld [smem:[#allocation2 + $0x80]]
        %v261 = vstv %s260
        %v262 = vmul.f32 %v259, %v261
        %v263 = vld [vmem:[%s233] sm:$0x3]
        %s264 = sld [smem:[#allocation2 + $0x81]]
        %v265 = vstv %s264
        %v266 = vmul.f32 %v263, %v265
        %v267 = vadd.f32 %v262, %v266
        %v268 = vld [vmem:[%s239] sm:$0x3]
        %s269 = sld [smem:[#allocation2 + $0x82]]
        %v270 = vstv %s269
        %v271 = vmul.f32 %v268, %v270
        %v272 = vadd.f32 %v267, %v271
        %v273 = vld [vmem:[%s245] sm:$0x3]
        %s274 = sld [smem:[#allocation2 + $0x83]]
        %v275 = vstv %s274
        %v276 = vmul.f32 %v273, %v275
        %v277 = vadd.f32 %v272, %v276
        %s278 = sld [smem:[#allocation4 + $0x1]]
        %v279 = vstv %s278
        %v280 = vadd.f32 %v277, %v279
        %s281 = scalar_lea.vmem %s228, 2
        %282 = vst.msk [vmem:[%s281] sm:$0x3] %vm257, %v280
        %v283 = vld [vmem:[%s220] sm:$0x3]
        %s284 = sld [smem:[#allocation2 + $0x100]]
        %v285 = vstv %s284
        %v286 = vmul.f32 %v283, %v285
        %v287 = vld [vmem:[%s233] sm:$0x3]
        %s288 = sld [smem:[#allocation2 + $0x101]]
        %v289 = vstv %s288
        %v290 = vmul.f32 %v287, %v289
        %v291 = vadd.f32 %v286, %v290
        %v292 = vld [vmem:[%s239] sm:$0x3]
        %s293 = sld [smem:[#allocation2 + $0x102]]
        %v294 = vstv %s293
        %v295 = vmul.f32 %v292, %v294
        %v296 = vadd.f32 %v291, %v295
        %v297 = vld [vmem:[%s245] sm:$0x3]
        %s298 = sld [smem:[#allocation2 + $0x103]]
        %v299 = vstv %s298
        %v300 = vmul.f32 %v297, %v299
        %v301 = vadd.f32 %v296, %v300
        %s302 = sld [smem:[#allocation4 + $0x2]]
        %v303 = vstv %s302
        %v304 = vadd.f32 %v301, %v303
        %s305 = scalar_lea.vmem %s228, 4
        %306 = vst.msk [vmem:[%s305] sm:$0x3] %vm257, %v304
        %p307 = scmp.lt.s32.totalorder %s20, 1
        %s308 = scalar_select %p307, %s20, 1
        %p309 = scmp.lt.s32.totalorder %s21, 0
        %s310 = scalar_select %p309, %s21, 0
        %s311 = smul.addr %s310, 2
        %s312 = smul.addr %s308, 6
        %s313 = sadd.s32 %s311, %s312
        %s314 = scalar_lea.vmem %s3, %s313
        // Predicated region
        $region41: #{model4band_forward.1} parent=31 // pred_check
          %p315 = pneg %p118
        $region42: #{model4band_forward.1} parent=31 // pred_check_branch
          %317 = sbr.rel (%p315) target = $region44
        $region43: #{model4band_forward.1} parent=31 // pred_region
          _
        $region44: #{model4band_forward.1} parent=31 // pred_fallthru
          _
      $region32: #{model4band_forward.1} parent=5 // pred_fallthru
        _
      %p318 = scmp.le.s32.totalorder 2, %s11
      // Predicated region
      $region45: #{model4band_forward.1} parent=5 // pred_check
        %p319 = pneg %p318
      $region46: #{model4band_forward.1} parent=5 // pred_check_branch
        %321 = sbr.rel (%p319) target = $region48
      $region47: #{model4band_forward.1} parent=5 // pred_region
        %s322 = ssub.s32 %s11, 2
        // Predicated region
        $region49: #{model4band_forward.1} parent=47 // pred_check
          %p323 = pneg %p124
        $region50: #{model4band_forward.1} parent=47 // pred_check_branch
          %325 = sbr.rel (%p323) target = $region52
        $region51: #{model4band_forward.1} parent=47 // pred_region
          %p326 = scmp.lt.s32.totalorder %s22, 1
          %s327 = scalar_select %p326, %s22, 1
          %p328 = scmp.lt.s32.totalorder %s23, 0
          %s329 = scalar_select %p328, %s23, 0
          %s330 = smul.addr %s329, 2
          %s331 = smul.addr %s327, 6
          %s332 = sadd.s32 %s330, %s331
          %s333 = scalar_lea.vmem %s3, %s332
        $region52: #{model4band_forward.1} parent=47 // pred_fallthru
          _
      $region48: #{model4band_forward.1} parent=5 // pred_fallthru
        _
    $region6: #{model4band_forward.1} parent=1 // loop_footer
      %s15 = sadd.s32 1, %s11
    $region7: #{model4band_forward.1} parent=1 // loop_footer_branch
      %10 = sbr.rel target = $region3
    $region8: #{model4band_forward.1} parent=1 // loop_exit
      _
    %334 = vsyncpa [#allocation3], 1
    %s335 = scalar_lea.sflag [#allocation3], 1
    %336 = vsyncpa %s335, 1
    %337 = vsyncpa [#allocation5], 1

</llo_original>
